<compile_context>
chip_gen: v6e
topology: v6e:2x2x1
jax: 0.10.0
libtpu: 0.0.40
codegen_flags: <defaults>
</compile_context>

<pallas_src>
import functools

import jax
import jax.numpy as jnp
from jax import lax
from jax.experimental import pallas as pl
from jax.experimental.pallas import tpu as pltpu

EPS = 1e-05
_MIB = 1024 * 1024


def _round_up(x, m):
    return ((x + m - 1) // m) * m


def _vmem_limit_bytes():
    """Scoped-VMEM limit sized per generation (v7x: 64 MiB/TC, v5e/v6e: 128 MiB)."""
    try:
        cap = int(pltpu.get_tpu_info().vmem_capacity_bytes)
    except Exception:  # not queryable: be conservative (v7x-sized)
        cap = 64 * _MIB
    return min(cap // 2, 64 * _MIB)


# ---------------------------------------------------------------------------------------
# Fast path: whole x resident in VMEM -> single pass (1R + 1W of x), centered variance.
# ---------------------------------------------------------------------------------------
def _resident_kernel(x_ref, w_ref, b_ref, rm_ref, rv_ref,
                     out_ref, nrm_ref, nrv_ref, *, inv_n, momentum, eps):
    x = x_ref[...].astype(jnp.float32)
    mean = jnp.sum(x, axis=0, keepdims=True) * inv_n
    xc = x - mean
    var = jnp.sum(xc * xc, axis=0, keepdims=True) * inv_n          # biased (unbiased=False)
    scale = lax.rsqrt(var + eps) * w_ref[...]
    out_ref[...] = (xc * scale + b_ref[...]).astype(out_ref.dtype)
    nrm_ref[...] = (1.0 - momentum) * rm_ref[...] + momentum * mean
    nrv_ref[...] = (1.0 - momentum) * rv_ref[...] + momentum * var


# ---------------------------------------------------------------------------------------
# Streaming path, call 1: per-column sum / sum(x^2) over the row axis.
# ---------------------------------------------------------------------------------------
def _stats_kernel(x_ref, sum_ref, sumsq_ref, acc_s, acc_q,
                  *, n_rows, tile_n, ragged, use_8row):
    i = pl.program_id(1)                       # N-tile index (reduction axis, innermost)

    @pl.when(i == 0)
    def _init():
        acc_s[...] = jnp.zeros_like(acc_s)
        acc_q[...] = jnp.zeros_like(acc_q)

    x = x_ref[...].astype(jnp.float32)
    if ragged:  # static flag: masking code only emitted when the last N tile is partial
        row = lax.broadcasted_iota(jnp.int32, x.shape, 0) + i * tile_n
        x = jnp.where(row < n_rows, x, 0.0)

    if use_8row:
        # Accumulate into 8 sublanes with pure VALU vreg adds; the 8->1 cross-sublane
        # (XLU) reduction happens exactly once, in the finalize below.
        x3 = x.reshape(tile_n // 8, 8, x.shape[1])
        acc_s[...] += jnp.sum(x3, axis=0)
        acc_q[...] += jnp.sum(x3 * x3, axis=0)
    else:
        acc_s[0:1, :] += jnp.sum(x, axis=0, keepdims=True)
        acc_q[0:1, :] += jnp.sum(x * x, axis=0, keepdims=True)

    @pl.when(i == pl.num_programs(1) - 1)
    def _finalize():
        sum_ref[...] = jnp.sum(acc_s[...], axis=0, keepdims=True)
        sumsq_ref[...] = jnp.sum(acc_q[...], axis=0, keepdims=True)


# ---------------------------------------------------------------------------------------
# Streaming path, call 2: out = x * scale + shift (normalization + affine folded).
# ---------------------------------------------------------------------------------------
def _apply_kernel(x_ref, scale_ref, shift_ref, out_ref):
    x = x_ref[...].astype(jnp.float32)
    out_ref[...] = (x * scale_ref[...] + shift_ref[...]).astype(out_ref.dtype)


def multi_head_batch_norm(x, weight, bias, running_mean, running_var, n_heads,
                          momentum=0.1, eps=EPS, *,
                          block_target_bytes=4 * _MIB,
                          force_streaming=False):
    """Training-mode forward of MultiHeadBatchNorm.

    x: (N, in_feats); weight/bias/running_mean/running_var: (n_heads, in_feats // n_heads)
    Returns (out[N, n_heads, hf], new_running_mean, new_running_var)  (biased running var,
    matching the module's explicit code path).
    """
    N, in_feats = x.shape
    assert in_feats % n_heads == 0
    head_feats = in_feats // n_heads
    D = in_feats
    out_dtype = x.dtype

    w = weight.reshape(1, D).astype(jnp.float32)
    b = bias.reshape(1, D).astype(jnp.float32)
    rm = running_mean.reshape(1, D).astype(jnp.float32)
    rv = running_var.reshape(1, D).astype(jnp.float32)

    vmem_limit = _vmem_limit_bytes()

    # ---------------------------- fast VMEM-resident path ------------------------------
    if (not force_streaming) and 8 * N * D * 4 <= vmem_limit:
        kernel = functools.partial(_resident_kernel, inv_n=1.0 / N,
                                   momentum=float(momentum), eps=float(eps))
        mat_spec = pl.BlockSpec((N, D), lambda i: (0, 0))
        row_spec = pl.BlockSpec((1, D), lambda i: (0, 0))
        out, new_rm, new_rv = pl.pallas_call(
            kernel,
            out_shape=(jax.ShapeDtypeStruct((N, D), out_dtype),
                       jax.ShapeDtypeStruct((1, D), jnp.float32),
                       jax.ShapeDtypeStruct((1, D), jnp.float32)),
            grid=(1,),
            in_specs=[mat_spec, row_spec, row_spec, row_spec, row_spec],
            out_specs=(mat_spec, row_spec, row_spec),
            compiler_params=pltpu.CompilerParams(vmem_limit_bytes=vmem_limit),
        )(x, w, b, rm, rv)
        out = out.reshape(N, n_heads, head_feats)
        new_rm = new_rm.reshape(n_heads, head_feats).astype(running_mean.dtype)
        new_rv = new_rv.reshape(n_heads, head_feats).astype(running_var.dtype)
        return out, new_rm, new_rv

    # --------------------------------- streaming path ----------------------------------
    # Lane-folding for tiny per-row widths (free row-major reshape, no padding traffic).
    fold = 1
    if D < 128 and 128 % D == 0 and N % (128 // D) == 0:
        fold = 128 // D
    x2 = x if fold == 1 else x.reshape(N // fold, fold * D)
    n_rows, De = x2.shape

    # Feature-axis tiling: lane-dense 128-multiple tiles; guarantee >= 2 D tiles for the
    # stats call when the width allows it (v7x megacore), keeping tiles >= 128 wide.
    if De % 128 == 0:
        tile_d = next(t for t in (512, 256, 128) if De % t == 0)
        if De // tile_d == 1 and tile_d >= 256:
            tile_d //= 2
    else:
        tile_d = De          # one full-width block (block dim == array dim is allowed)
    n_dt = De // tile_d

    # Row-axis tiling: keep each x block near block_target_bytes (2-4 MiB sweet spot).
    rows_per_block = max(8, (block_target_bytes // (tile_d * 4)) // 8 * 8)
    if n_rows <= rows_per_block:
        tile_n = n_rows      # single full-height block (any value allowed)
    else:
        tile_n = rows_per_block
    n_nt = pl.cdiv(n_rows, tile_n)
    ragged = (n_rows % tile_n) != 0
    use_8row = (tile_d % 128 == 0) and (tile_n % 8 == 0)

    # ---- call 1: per-column sum / sum(x^2) ----
    stats_kernel = functools.partial(_stats_kernel, n_rows=n_rows, tile_n=tile_n,
                                     ragged=ragged, use_8row=use_8row)
    col_sum, col_sumsq = pl.pallas_call(
        stats_kernel,
        out_shape=(jax.ShapeDtypeStruct((1, De), jnp.float32),
                   jax.ShapeDtypeStruct((1, De), jnp.float32)),
        grid_spec=pltpu.PrefetchScalarGridSpec(
            num_scalar_prefetch=0,
            grid=(n_dt, n_nt),                              # reduction (N) axis innermost
            in_specs=[pl.BlockSpec((tile_n, tile_d), lambda j, i: (i, j),
                                   pipeline_mode=pl.Buffered(3))],
            out_specs=(pl.BlockSpec((1, tile_d), lambda j, i: (0, j)),
                       pl.BlockSpec((1, tile_d), lambda j, i: (0, j))),
            scratch_shapes=[pltpu.VMEM((8, tile_d), jnp.float32),
                            pltpu.VMEM((8, tile_d), jnp.float32)]),
        compiler_params=pltpu.CompilerParams(
            dimension_semantics=("parallel", "arbitrary"),
            vmem_limit_bytes=vmem_limit),
    )(x2)

    # ---- tiny O(D) finalize as plain XLA between the two calls ----
    if fold > 1:
        col_sum = jnp.sum(col_sum.reshape(fold, D), axis=0, keepdims=True)
        col_sumsq = jnp.sum(col_sumsq.reshape(fold, D), axis=0, keepdims=True)
    inv_n = 1.0 / N
    mean = col_sum * inv_n
    # Note: single-pass E[x^2] - mean^2 can lose precision when |mean| >> std; the
    # VMEM-resident fast path uses a centered variance instead.
    var = jnp.maximum(col_sumsq * inv_n - mean * mean, 0.0)
    scale = lax.rsqrt(var + eps) * w
    shift = b - mean * scale
    new_rm = (1.0 - momentum) * rm + momentum * mean
    new_rv = (1.0 - momentum) * rv + momentum * var
    if fold > 1:
        scale_e = jnp.tile(scale, (1, fold))
        shift_e = jnp.tile(shift, (1, fold))
    else:
        scale_e, shift_e = scale, shift

    # ---- call 2: elementwise apply, both grid axes "parallel" (v7x megacore) ----
    out2 = pl.pallas_call(
        _apply_kernel,
        out_shape=jax.ShapeDtypeStruct((n_rows, De), out_dtype),
        grid_spec=pltpu.PrefetchScalarGridSpec(
            num_scalar_prefetch=0,
            grid=(n_nt, n_dt),
            in_specs=[pl.BlockSpec((tile_n, tile_d), lambda i, j: (i, j)),
                      pl.BlockSpec((1, tile_d), lambda i, j: (0, j)),
                      pl.BlockSpec((1, tile_d), lambda i, j: (0, j))],
            out_specs=pl.BlockSpec((tile_n, tile_d), lambda i, j: (i, j))),
        compiler_params=pltpu.CompilerParams(
            dimension_semantics=("parallel", "parallel"),
            vmem_limit_bytes=vmem_limit),
    )(x2, scale_e, shift_e)

    out = out2.reshape(N, n_heads, head_feats)
    new_rm = new_rm.reshape(n_heads, head_feats).astype(running_mean.dtype)
    new_rv = new_rv.reshape(n_heads, head_feats).astype(running_var.dtype)
    return out, new_rm, new_rv


# ---------------------------------------------------------------------------------------
# Pure-JAX reference + checks.
# ---------------------------------------------------------------------------------------
def _reference(x, weight, bias, running_mean, running_var, n_heads, momentum=0.1, eps=EPS):
    N, F = x.shape
    hf = F // n_heads
    xr = x.reshape(N, n_heads, hf).astype(jnp.float32)
    mean = xr.mean(axis=0)
    var = ((xr - mean) ** 2).mean(axis=0)                  # unbiased=False
    out = (xr - mean) * lax.rsqrt(var + eps) * weight + bias
    new_rm = (1.0 - momentum) * running_mean + momentum * mean
    new_rv = (1.0 - momentum) * running_var + momentum * var
    return out, new_rm, new_rv


def _check(N, n_heads, in_feats, key, **kw):
    hf = in_feats // n_heads
    kx, k1, k2, k3, k4 = jax.random.split(key, 5)
    x = jax.random.normal(kx, (N, in_feats), dtype=jnp.float32) * 2.0 + 1.5
    weight = jax.random.normal(k1, (n_heads, hf), dtype=jnp.float32)
    bias = jax.random.normal(k2, (n_heads, hf), dtype=jnp.float32)
    running_mean = jax.random.normal(k3, (n_heads, hf), dtype=jnp.float32)
    running_var = jax.random.uniform(k4, (n_heads, hf), dtype=jnp.float32) + 0.5

    out, nrm, nrv = multi_head_batch_norm(
        x, weight, bias, running_mean, running_var, n_heads, **kw)
    jax.block_until_ready(out)
    jax.block_until_ready(nrm)
    jax.block_until_ready(nrv)

    r_out, r_rm, r_rv = _reference(x, weight, bias, running_mean, running_var, n_heads)
    assert out.shape == (N, n_heads, hf)
    assert jnp.allclose(out, r_out, atol=2e-4, rtol=2e-4)
    assert jnp.allclose(nrm, r_rm, atol=1e-4, rtol=1e-4)
    assert jnp.allclose(nrv, r_rv, atol=1e-4, rtol=1e-4)


if __name__ == "__main__":
    key = jax.random.PRNGKey(0)
    keys = jax.random.split(key, 5)

    # VMEM-resident single-pass fast path (typical small/medium SAGN hidden sizes).
    _check(16, 4, 32, keys[0])
    _check(1040, 2, 256, keys[1])

    # Streaming path: multiple N tiles + ragged last tile + 2 D tiles (forced small
    # blocks so the small test shape exercises the large-N code path).
    _check(1040, 2, 256, keys[2], force_streaming=True, block_target_bytes=64 * 1024)

    # Streaming path with lane folding for tiny per-row width (D=64 folded to 128 lanes).
    _check(96, 1, 64, keys[3], force_streaming=True, block_target_bytes=32 * 1024)

    # Streaming path with a feature width that is not a multiple of 128 (full-width blocks).
    _check(520, 2, 192, keys[4], force_streaming=True, block_target_bytes=64 * 1024)

    print("KERNEL_OK")
</pallas_src>

<mosaic_0001>
module attributes {stable_mosaic.version = 11 : i64} {
  func.func @_resident_kernel(%arg0: i32, %arg1: memref<16x32xf32, #tpu.memory_space<vmem>>, %arg2: memref<1x32xf32, #tpu.memory_space<vmem>>, %arg3: memref<1x32xf32, #tpu.memory_space<vmem>>, %arg4: memref<1x32xf32, #tpu.memory_space<vmem>>, %arg5: memref<1x32xf32, #tpu.memory_space<vmem>>, %arg6: memref<16x32xf32, #tpu.memory_space<vmem>>, %arg7: memref<1x32xf32, #tpu.memory_space<vmem>>, %arg8: memref<1x32xf32, #tpu.memory_space<vmem>>) attributes {dimension_semantics = [#tpu.dimension_semantics<arbitrary>], iteration_bounds = array<i64: 1>, scalar_prefetch = 0 : i64, scratch_operands = 0 : i64, tpu.core_type = #tpu.core_type<tc>, window_params = [{pipeline_mode = #tpu.pipeline_mode<synchronous>, transform_indices = @transform_0, window_bounds = array<i64: 16, 32>}, {pipeline_mode = #tpu.pipeline_mode<synchronous>, transform_indices = @transform_1, window_bounds = array<i64: 1, 32>}, {pipeline_mode = #tpu.pipeline_mode<synchronous>, transform_indices = @transform_2, window_bounds = array<i64: 1, 32>}, {pipeline_mode = #tpu.pipeline_mode<synchronous>, transform_indices = @transform_3, window_bounds = array<i64: 1, 32>}, {pipeline_mode = #tpu.pipeline_mode<synchronous>, transform_indices = @transform_4, window_bounds = array<i64: 1, 32>}, {pipeline_mode = #tpu.pipeline_mode<synchronous>, transform_indices = @transform_5, window_bounds = array<i64: 16, 32>}, {pipeline_mode = #tpu.pipeline_mode<synchronous>, transform_indices = @transform_6, window_bounds = array<i64: 1, 32>}, {pipeline_mode = #tpu.pipeline_mode<synchronous>, transform_indices = @transform_7, window_bounds = array<i64: 1, 32>}]} {
    %c0 = arith.constant 0 : index
    %c0_0 = arith.constant 0 : index
    %0 = vector.load %arg1[%c0, %c0_0] : memref<16x32xf32, #tpu.memory_space<vmem>>, vector<16x32xf32>
    %cst = arith.constant dense<0.000000e+00> : vector<32xf32>
    %1 = vector.multi_reduction <add>, %0, %cst [0] : vector<16x32xf32> to vector<32xf32>
    %2 = vector.shape_cast %1 : vector<32xf32> to vector<1x32xf32>
    %cst_1 = arith.constant 6.250000e-02 : f32
    %3 = vector.broadcast %cst_1 : f32 to vector<1x32xf32>
    %4 = arith.mulf %2, %3 : vector<1x32xf32>
    %5 = vector.broadcast %4 : vector<1x32xf32> to vector<16x32xf32>
    %6 = arith.subf %0, %5 : vector<16x32xf32>
    %7 = arith.mulf %6, %6 : vector<16x32xf32>
    %cst_2 = arith.constant dense<0.000000e+00> : vector<32xf32>
    %8 = vector.multi_reduction <add>, %7, %cst_2 [0] : vector<16x32xf32> to vector<32xf32>
    %9 = vector.shape_cast %8 : vector<32xf32> to vector<1x32xf32>
    %cst_3 = arith.constant 6.250000e-02 : f32
    %10 = vector.broadcast %cst_3 : f32 to vector<1x32xf32>
    %11 = arith.mulf %9, %10 : vector<1x32xf32>
    %cst_4 = arith.constant 9.99999974E-6 : f32
    %12 = vector.broadcast %cst_4 : f32 to vector<1x32xf32>
    %13 = arith.addf %11, %12 : vector<1x32xf32>
    %14 = math.rsqrt %13 : vector<1x32xf32>
    %c0_5 = arith.constant 0 : index
    %c0_6 = arith.constant 0 : index
    %15 = vector.load %arg2[%c0_5, %c0_6] : memref<1x32xf32, #tpu.memory_space<vmem>>, vector<1x32xf32>
    %16 = arith.mulf %14, %15 : vector<1x32xf32>
    %17 = vector.broadcast %16 : vector<1x32xf32> to vector<16x32xf32>
    %18 = arith.mulf %6, %17 : vector<16x32xf32>
    %c0_7 = arith.constant 0 : index
    %c0_8 = arith.constant 0 : index
    %19 = vector.load %arg3[%c0_7, %c0_8] : memref<1x32xf32, #tpu.memory_space<vmem>>, vector<1x32xf32>
    %20 = vector.broadcast %19 : vector<1x32xf32> to vector<16x32xf32>
    %21 = arith.addf %18, %20 : vector<16x32xf32>
    %c0_9 = arith.constant 0 : index
    %c0_10 = arith.constant 0 : index
    %22 = vector.load %arg6[%c0_9, %c0_10] : memref<16x32xf32, #tpu.memory_space<vmem>>, vector<16x32xf32>
    tpu.vector_store %arg6[%c0_9, %c0_10], %21 {strides = array<i32>} : memref<16x32xf32, #tpu.memory_space<vmem>>, vector<16x32xf32>,
    %c0_11 = arith.constant 0 : index
    %c0_12 = arith.constant 0 : index
    %23 = vector.load %arg4[%c0_11, %c0_12] : memref<1x32xf32, #tpu.memory_space<vmem>>, vector<1x32xf32>
    %cst_13 = arith.constant 0.899999976 : f32
    %24 = vector.broadcast %cst_13 : f32 to vector<1x32xf32>
    %25 = arith.mulf %24, %23 : vector<1x32xf32>
    %cst_14 = arith.constant 1.000000e-01 : f32
    %26 = vector.broadcast %cst_14 : f32 to vector<1x32xf32>
    %27 = arith.mulf %26, %4 : vector<1x32xf32>
    %28 = arith.addf %25, %27 : vector<1x32xf32>
    %c0_15 = arith.constant 0 : index
    %c0_16 = arith.constant 0 : index
    %29 = vector.load %arg7[%c0_15, %c0_16] : memref<1x32xf32, #tpu.memory_space<vmem>>, vector<1x32xf32>
    tpu.vector_store %arg7[%c0_15, %c0_16], %28 {strides = array<i32>} : memref<1x32xf32, #tpu.memory_space<vmem>>, vector<1x32xf32>,
    %c0_17 = arith.constant 0 : index
    %c0_18 = arith.constant 0 : index
    %30 = vector.load %arg5[%c0_17, %c0_18] : memref<1x32xf32, #tpu.memory_space<vmem>>, vector<1x32xf32>
    %cst_19 = arith.constant 0.899999976 : f32
    %31 = vector.broadcast %cst_19 : f32 to vector<1x32xf32>
    %32 = arith.mulf %31, %30 : vector<1x32xf32>
    %cst_20 = arith.constant 1.000000e-01 : f32
    %33 = vector.broadcast %cst_20 : f32 to vector<1x32xf32>
    %34 = arith.mulf %33, %11 : vector<1x32xf32>
    %35 = arith.addf %32, %34 : vector<1x32xf32>
    %c0_21 = arith.constant 0 : index
    %c0_22 = arith.constant 0 : index
    %36 = vector.load %arg8[%c0_21, %c0_22] : memref<1x32xf32, #tpu.memory_space<vmem>>, vector<1x32xf32>
    tpu.vector_store %arg8[%c0_21, %c0_22], %35 {strides = array<i32>} : memref<1x32xf32, #tpu.memory_space<vmem>>, vector<1x32xf32>,
    return
  }
  func.func @transform_0(%arg0: i32) -> (i32, i32) {
    %c0_i32 = arith.constant 0 : i32
    %c0_i32_0 = arith.constant 0 : i32
    %c0_i32_1 = arith.constant 0 : i32
    return %c0_i32, %c0_i32_0 : i32, i32
  }
  func.func @transform_1(%arg0: i32) -> (i32, i32) {
    %c0_i32 = arith.constant 0 : i32
    %c0_i32_0 = arith.constant 0 : i32
    %c0_i32_1 = arith.constant 0 : i32
    return %c0_i32, %c0_i32_0 : i32, i32
  }
  func.func @transform_2(%arg0: i32) -> (i32, i32) {
    %c0_i32 = arith.constant 0 : i32
    %c0_i32_0 = arith.constant 0 : i32
    %c0_i32_1 = arith.constant 0 : i32
    return %c0_i32, %c0_i32_0 : i32, i32
  }
  func.func @transform_3(%arg0: i32) -> (i32, i32) {
    %c0_i32 = arith.constant 0 : i32
    %c0_i32_0 = arith.constant 0 : i32
    %c0_i32_1 = arith.constant 0 : i32
    return %c0_i32, %c0_i32_0 : i32, i32
  }
  func.func @transform_4(%arg0: i32) -> (i32, i32) {
    %c0_i32 = arith.constant 0 : i32
    %c0_i32_0 = arith.constant 0 : i32
    %c0_i32_1 = arith.constant 0 : i32
    return %c0_i32, %c0_i32_0 : i32, i32
  }
  func.func @transform_5(%arg0: i32) -> (i32, i32) {
    %c0_i32 = arith.constant 0 : i32
    %c0_i32_0 = arith.constant 0 : i32
    %c0_i32_1 = arith.constant 0 : i32
    return %c0_i32, %c0_i32_0 : i32, i32
  }
  func.func @transform_6(%arg0: i32) -> (i32, i32) {
    %c0_i32 = arith.constant 0 : i32
    %c0_i32_0 = arith.constant 0 : i32
    %c0_i32_1 = arith.constant 0 : i32
    return %c0_i32, %c0_i32_0 : i32, i32
  }
  func.func @transform_7(%arg0: i32) -> (i32, i32) {
    %c0_i32 = arith.constant 0 : i32
    %c0_i32_0 = arith.constant 0 : i32
    %c0_i32_1 = arith.constant 0 : i32
    return %c0_i32, %c0_i32_0 : i32, i32
  }
}

</mosaic_0001>

<llo_original>
// kernel: tpu_custom_call.1
$region0: #{tpu_custom_call.1}
  #allocation0 [shape = 'u32[]', space=smem, size = 0x4, offset = 0x4, fixed_abs, tag = 'smem constant byte address 0x4 - core index']
  #allocation1 [shape = 'u32[144,128]{1,0:T(1,128)}', space=vmem, size = 0x12000, scoped, tag = 'internal scratch']
  %s0 = inlined_call_operand.hbm [shape: f32[16,32], index: 0, kind: input, shape index: {}]
  %s1 = inlined_call_operand.vmem [shape: f32[1,32], index: 1, kind: input, shape index: {}]
  %s2 = inlined_call_operand.vmem [shape: f32[1,32], index: 2, kind: input, shape index: {}]
  %s3 = inlined_call_operand.vmem [shape: f32[1,32], index: 3, kind: input, shape index: {}]
  %s4 = inlined_call_operand.vmem [shape: f32[1,32], index: 4, kind: input, shape index: {}]
  %s5 = inlined_call_operand.hbm [shape: f32[16,32], index: 5, kind: output, shape index: {0}]
  %s6 = inlined_call_operand.hbm [shape: f32[1,32], index: 6, kind: output, shape index: {1}]
  %s7 = inlined_call_operand.hbm [shape: f32[1,32], index: 7, kind: output, shape index: {2}]
  %8 = xla_tuple %s5, %s6, %s7
  %s9 = sld [smem:[#allocation0]]
  $region50: #{tpu_custom_call.1} parent=0
    _
  %s11 = ssub.s32 1, %s9
  %s12 = scalar_select 0, %s11, %s9
  $region1: #{tpu_custom_call.1} parent=0
    #allocation2 [shape = 'u8[8192]{0}', space=vmem, size = 0x2000, scoped, tag = 'input window, operand 0, single buffered']
    #allocation3 [shape = 's32[1]{0}', space=sflag, size = 0x4, scoped, tag = 'scoped memory for tpu_custom_call.1']
    #allocation4 [shape = 's32[1]{0}', space=sflag, size = 0x4, scoped, tag = 'scoped memory for tpu_custom_call.1']
    #allocation5 [shape = 'u8[8192]{0}', space=vmem, size = 0x2000, scoped, tag = 'output window, operand 0, single buffered']
    #allocation6 [shape = 'u8[512]{0}', space=vmem, size = 0x400, scoped, tag = 'output window, operand 1, single buffered']
    #allocation7 [shape = 's32[1]{0}', space=sflag, size = 0x4, scoped, tag = 'scoped memory for tpu_custom_call.1']
    #allocation8 [shape = 'u8[512]{0}', space=vmem, size = 0x400, scoped, tag = 'output window, operand 2, single buffered']
    %13 = vsyncpa [#allocation3], 0
    %14 = vsyncpa [#allocation4], 0
    %15 = vsyncpa [#allocation7], 0
    // Predicated region
    $region2: #{tpu_custom_call.1} parent=1 // pred_check
      _
    $region3: #{tpu_custom_call.1} parent=1 // pred_check_branch
      %17 = sbr.rel (0) target = $region5
    $region4: #{tpu_custom_call.1} parent=1 // pred_region
      %s19 = ssub.s32 256, 256
      %20 = vsyncadd [#allocation3], %s19
      %s21 = sshll.u32 [#allocation2], 4
      %s22 = int_to_ptr.vmem [resolvable:$true] %s21
      %27 = dma.hbm_to_vmem [thread:$0]  %s0, 256, %s22, [#allocation3], 128, 128, 8
    $region5: #{tpu_custom_call.1} parent=1 // pred_fallthru
      _
    // Predicated region
    $region6: #{tpu_custom_call.1} parent=1 // pred_check
      _
    $region7: #{tpu_custom_call.1} parent=1 // pred_check_branch
      %29 = sbr.rel (0) target = $region9
    $region8: #{tpu_custom_call.1} parent=1 // pred_region
      _
    $region9: #{tpu_custom_call.1} parent=1 // pred_fallthru
      _
    // Predicated region
    $region10: #{tpu_custom_call.1} parent=1 // pred_check
      _
    $region11: #{tpu_custom_call.1} parent=1 // pred_check_branch
      %31 = sbr.rel (0) target = $region13
    $region12: #{tpu_custom_call.1} parent=1 // pred_region
      _
    $region13: #{tpu_custom_call.1} parent=1 // pred_fallthru
      _
    // Predicated region
    $region14: #{tpu_custom_call.1} parent=1 // pred_check
      _
    $region15: #{tpu_custom_call.1} parent=1 // pred_check_branch
      %33 = sbr.rel (0) target = $region17
    $region16: #{tpu_custom_call.1} parent=1 // pred_region
      _
    $region17: #{tpu_custom_call.1} parent=1 // pred_fallthru
      _
    // Predicated region
    $region18: #{tpu_custom_call.1} parent=1 // pred_check
      _
    $region19: #{tpu_custom_call.1} parent=1 // pred_check_branch
      %35 = sbr.rel (0) target = $region21
    $region20: #{tpu_custom_call.1} parent=1 // pred_region
      _
    $region21: #{tpu_custom_call.1} parent=1 // pred_fallthru
      _
    // Predicated region
    $region22: #{tpu_custom_call.1} parent=1 // pred_check
      _
    $region23: #{tpu_custom_call.1} parent=1 // pred_check_branch
      %37 = sbr.rel (0) target = $region25
    $region24: #{tpu_custom_call.1} parent=1 // pred_region
      %38 = dma.done [#allocation3], 256
    $region25: #{tpu_custom_call.1} parent=1 // pred_fallthru
      _
    %v39 = vld [vmem:[#allocation2] sm:$0xff]
    %v40 = vld [vmem:[#allocation2 + $0x8] sm:$0xff]
    %vm41 = vcmask 261120
    %v42 = vsel %vm41, %v39, 0.0
    %v43 = vsel %vm41, %v40, 0.0
    %v44 = vadd.f32 %v42, %v43
    %v45 = vrot.slane %v44, 4
    %v46 = vadd.f32 %v44, %v45
    %v47 = vrot.slane %v46, 2
    %v48 = vadd.f32 %v46, %v47
    %v49 = vrot.slane %v48, 1
    %v50 = vadd.f32 %v48, %v49
    %v51 = vmul.f32 %v50, 0.0625
    %v52 = vsub.f32 %v39, %v51
    %v53 = vsub.f32 %v40, %v51
    %v54 = vmul.f32 %v52, %v52
    %v55 = vmul.f32 %v53, %v53
    %v56 = vsel %vm41, %v54, 0.0
    %v57 = vsel %vm41, %v55, 0.0
    %v58 = vadd.f32 %v56, %v57
    %v59 = vrot.slane %v58, 4
    %v60 = vadd.f32 %v58, %v59
    %v61 = vrot.slane %v60, 2
    %v62 = vadd.f32 %v60, %v61
    %v63 = vrot.slane %v62, 1
    %v64 = vadd.f32 %v62, %v63
    %v65 = vmul.f32 %v64, 0.0625
    %v66 = vadd.f32 %v65, 1e-05
    %v67 = vrsqrt.pop %v66
    %v68 = vld [vmem:[%s1] sm:$0x1]
    %v69 = vmul.f32 %v67, %v68
    %v70 = vlaneseq
    %v71 = vshrl.u32 %v70, 7
    %v72 = vsub.s32 0, %v71
    %v73 = vrot.slane %v69, %v72
    %v74 = vmul.f32 %v52, %v73
    %v75 = vmul.f32 %v53, %v73
    %v76 = vld [vmem:[%s2] sm:$0x1]
    %v78 = vlaneseq
    %v79 = vshrl.u32 %v78, 7
    %v80 = vsub.s32 0, %v79
    %v81 = vrot.slane %v76, %v80
    %v83 = vadd.f32 %v74, %v81
    %v84 = vadd.f32 %v75, %v81
    %85 = vst.msk [vmem:[#allocation5] sm:$0xff] %vm41, %v83
    %86 = vst.msk [vmem:[#allocation5 + $0x8] sm:$0xff] %vm41, %v84
    %v87 = vld [vmem:[%s3] sm:$0x1]
    %v88 = vmul.f32 %v87, 0.9
    %v89 = vmul.f32 %v51, 0.1
    %v90 = vadd.f32 %v88, %v89
    %vm91 = vcmask 253952
    %92 = vst.msk [vmem:[#allocation6] sm:$0x1] %vm91, %v90
    %v93 = vld [vmem:[%s4] sm:$0x1]
    %v94 = vmul.f32 %v93, 0.9
    %v95 = vmul.f32 %v65, 0.1
    %v96 = vadd.f32 %v94, %v95
    %97 = vst.msk [vmem:[#allocation8] sm:$0x1] %vm91, %v96
    // Predicated region
    $region26: #{tpu_custom_call.1} parent=1 // pred_check
      _
    $region27: #{tpu_custom_call.1} parent=1 // pred_check_branch
      %99 = sbr.rel (0) target = $region29
    $region28: #{tpu_custom_call.1} parent=1 // pred_region
      %s101 = ssub.s32 256, 256
      %102 = vsyncadd [#allocation4], %s101
      %s103 = sshll.u32 [#allocation5], 4
      %s104 = int_to_ptr.vmem [resolvable:$true] %s103
      %109 = dma.vmem_to_hbm [thread:$0]  %s104, 256, %s5, [#allocation4], 128, 128, 8
    $region29: #{tpu_custom_call.1} parent=1 // pred_fallthru
      _
    // Predicated region
    $region30: #{tpu_custom_call.1} parent=1 // pred_check
      _
    $region31: #{tpu_custom_call.1} parent=1 // pred_check_branch
      %111 = sbr.rel (0) target = $region33
    $region32: #{tpu_custom_call.1} parent=1 // pred_region
      %s113 = ssub.s32 16, 16
      %114 = vsyncadd [#allocation7], %s113
      %s116 = sshll.u32 [#allocation6], 4
      %s117 = int_to_ptr.vmem [resolvable:$true] %s116
      %119 = dma.vmem_to_hbm [thread:$0]  %s117, 16, %s6, [#allocation7]
    $region33: #{tpu_custom_call.1} parent=1 // pred_fallthru
      _
    // Predicated region
    $region34: #{tpu_custom_call.1} parent=1 // pred_check
      _
    $region35: #{tpu_custom_call.1} parent=1 // pred_check_branch
      %121 = sbr.rel (0) target = $region37
    $region36: #{tpu_custom_call.1} parent=1 // pred_region
      %s123 = ssub.s32 16, 16
      %124 = vsyncadd [#allocation7], %s123
      %s126 = sshll.u32 [#allocation8], 4
      %s127 = int_to_ptr.vmem [resolvable:$true] %s126
      %129 = dma.vmem_to_hbm [thread:$0]  %s127, 16, %s7, [#allocation7]
    $region37: #{tpu_custom_call.1} parent=1 // pred_fallthru
      _
    // Predicated region
    $region38: #{tpu_custom_call.1} parent=1 // pred_check
      _
    $region39: #{tpu_custom_call.1} parent=1 // pred_check_branch
      %131 = sbr.rel (0) target = $region41
    $region40: #{tpu_custom_call.1} parent=1 // pred_region
      %132 = dma.done [#allocation4], 256
    $region41: #{tpu_custom_call.1} parent=1 // pred_fallthru
      _
    // Predicated region
    $region42: #{tpu_custom_call.1} parent=1 // pred_check
      _
    $region43: #{tpu_custom_call.1} parent=1 // pred_check_branch
      %134 = sbr.rel (0) target = $region45
    $region44: #{tpu_custom_call.1} parent=1 // pred_region
      %135 = dma.done [#allocation7], 16
    $region45: #{tpu_custom_call.1} parent=1 // pred_fallthru
      _
    // Predicated region
    $region46: #{tpu_custom_call.1} parent=1 // pred_check
      _
    $region47: #{tpu_custom_call.1} parent=1 // pred_check_branch
      %137 = sbr.rel (0) target = $region49
    $region48: #{tpu_custom_call.1} parent=1 // pred_region
      %138 = dma.done [#allocation7], 16
    $region49: #{tpu_custom_call.1} parent=1 // pred_fallthru
      _
    %139 = vsyncpa [#allocation3], 1
    %140 = vsyncpa [#allocation4], 1
    %141 = vsyncpa [#allocation7], 1

</llo_original>
